<compile_context>
chip_gen: v7x
topology: tpu7x:2x2x1
jax: 0.10.0
libtpu: 0.0.40
codegen_flags: <defaults>
</compile_context>

<pallas_src>
import functools

import jax
import jax.numpy as jnp
from jax import lax
from jax.experimental import pallas as pl
from jax.experimental.pallas import tpu as pltpu

EMB_DIM = 32


def _round_up(x, m):
    return (x + m - 1) // m * m


def _pad_to(a, shape):
    return jnp.pad(a, [(0, s - d) for d, s in zip(a.shape, shape)])


def _mlp_mask_kernel(f_ref, e_ref, w1m_ref, w2_ref, b2_ref, w3_ref, b3_ref,
                     o_ref):
    """One batch tile of: (masked Linear + emb contribution + ReLU), Linear+ReLU, Linear.

    f_ref   : (Bt, F)    f32  raw features (mask already folded into w1m)
    e_ref   : (Bt, h1p)  f32  precomputed tissue/sex embedding contribution + b1
    w1m_ref : (F, h1p)   bf16 mask-folded first-layer weights (feature block)
    w2_ref  : (h1p, h2p) bf16 ; b2_ref (1, h2p) f32
    w3_ref  : (h2p, out) bf16 ; b3_ref (1, out) f32
    o_ref   : (Bt, out)  f32

    Matmuls run on the MXU with f32 accumulation; bias-add/ReLU in f32.
    The batch-wise L1 output normalization lives in the wrapper because it
    reduces across batch tiles (this grid axis is "parallel").
    """
    x = f_ref[...].astype(jnp.bfloat16)                                  # in-kernel cast
    h = jnp.dot(x, w1m_ref[...], preferred_element_type=jnp.float32)
    h = jnp.maximum(h + e_ref[...], 0.0).astype(jnp.bfloat16)            # first_layer
    h = jnp.dot(h, w2_ref[...], preferred_element_type=jnp.float32) + b2_ref[...]
    h = jnp.maximum(h, 0.0).astype(jnp.bfloat16)                         # mediate_layer
    o_ref[...] = jnp.dot(h, w3_ref[...],
                         preferred_element_type=jnp.float32) + b3_ref[...]


def prepare_params(params, feature_channel, embedding_dim=EMB_DIM):
    """One-time inference-side weight transform (NOT per-call):

    * split w1 by input source; zero-pad hidden widths to multiples of 128
      (lane-dense; exact since relu(0 @ 0 + 0) == 0 and padded w2/w3 rows are 0),
    * precompute the embedding-path contribution to layer 1 as a single
      (num_tissue * num_sex, h1p) f32 table with b1 folded in, indexed by
      tissue_index * num_sex + sex_index — replaces two K=32 MXU matmuls,
    * keep the feature block of w1 in f32 so the per-call mask fold stays
      accurate (bf16 cast happens after the fold),
    * cast the resident second/third-layer weights to bf16.
    """
    F, E = feature_channel, embedding_dim
    w1, b1 = params["w1"], params["b1"]
    w2, b2 = params["w2"], params["b2"]
    w3, b3 = params["w3"], params["b3"]
    h1, h2 = w1.shape[1], w2.shape[1]
    h1p, h2p = _round_up(h1, 128), _round_up(h2, 128)

    w1f = _pad_to(w1[:F], (F, h1p)).astype(jnp.float32)
    w1t = _pad_to(w1[F:F + E], (E, h1p)).astype(jnp.float32)
    w1s = _pad_to(w1[F + E:F + 2 * E], (E, h1p)).astype(jnp.float32)
    b1p = _pad_to(b1, (1, h1p)).astype(jnp.float32)

    t_tab = params["tissue_embedding"].astype(jnp.float32) @ w1t        # (32, h1p)
    s_tab = params["sex_embedding"].astype(jnp.float32) @ w1s           # (4, h1p)
    emb_table = (t_tab[:, None, :] + s_tab[None, :, :]
                 + b1p[None, :, :]).reshape(-1, h1p)                    # (128, h1p)

    return {
        "w1f_f32": w1f,                       # mask folded per-call, then bf16
        "emb_table": emb_table,               # (32*4, h1p) f32, b1 folded in
        "num_sex": int(params["sex_embedding"].shape[0]),
        "w2": _pad_to(w2, (h1p, h2p)).astype(jnp.bfloat16),
        "b2": _pad_to(b2, (1, h2p)).astype(jnp.float32),
        "w3": _pad_to(w3, (h2p, w3.shape[1])).astype(jnp.bfloat16),
        "b3": b3.astype(jnp.float32),
        "mask": params["mask"].astype(jnp.float32),
    }


def _pick_batch_tile(B, batch_tile):
    """Batch tile selection.

    * B > batch_tile  : use batch_tile; the ragged last tile is handled by the
      grid (OOB reads give garbage rows whose outputs are discarded — rows are
      independent through every matmul, so no contamination).
    * B <= batch_tile : one tile with b_tile == B (block == full array dim is
      always legal, no padding / OOB at all).  If B is large enough and splits
      cleanly, use two tiles so both v7x TensorCores get a grid step.
    """
    if B > batch_tile:
        return batch_tile
    if B >= 1024 and B % 16 == 0:
        return B // 2
    return B


def fcnet_embedding_mask_forward(prep, feature, tissue_index, sex_index, *,
                                 limit_feature_number, if_norm=True,
                                 batch_tile=2048):
    """Mirrors FCNet_Embedding_Mask.forward (if_embedding=True).

    Returns (result, mask_row) where mask_row has shape (1, F); the PyTorch
    module's (B, F) mask_vector is `jnp.broadcast_to(mask_row, feature.shape)`
    (not materialized here to avoid a B*F HBM write).
    """
    assert batch_tile % 16 == 0
    B, F = feature.shape
    h1p = prep["emb_table"].shape[-1]
    h2p = prep["b2"].shape[-1]
    out_c = prep["b3"].shape[-1]

    # --- mask construction (glue: sigmoid + topk + scatter; not a hot path) ---
    mask_sig = jax.nn.sigmoid(prep["mask"])                     # (F,)
    vals, idx = jax.lax.top_k(mask_sig, limit_feature_number)
    mask_row = jnp.zeros((F,), jnp.float32).at[idx].set(vals)   # (F,)

    # --- fold the mask into the first-layer weight (per-call, O(F*h1p)) ------
    w1m = (mask_row[:, None] * prep["w1f_f32"]).astype(jnp.bfloat16)   # (F, h1p)

    # --- embedding contribution: one gather from the precomputed table -------
    comb_idx = tissue_index * prep["num_sex"] + sex_index
    emb = prep["emb_table"][comb_idx]                           # (B, h1p) f32

    # --- batch tiling (no wrapper-side pad; ragged last tile via the grid) ---
    b_tile = _pick_batch_tile(B, batch_tile)
    grid = (pl.cdiv(B, b_tile),)

    def row_spec(shape):   # batch-tiled operand
        return pl.BlockSpec(shape, lambda i: (i, 0))

    def rep_spec(shape):   # resident operand (weights / biases)
        return pl.BlockSpec(shape, lambda i: (0, 0))

    # Advisory cost so XLA overlaps the tiny top-k / gather glue with the call.
    flops = 2 * B * (F * h1p + h1p * h2p + h2p * out_c)
    bytes_accessed = (B * F * 4 + B * h1p * 4 + B * out_c * 4
                      + F * h1p * 2 + h1p * h2p * 2 + h2p * out_c * 2
                      + (h2p + out_c) * 4)
    cost = pl.CostEstimate(flops=flops, transcendentals=0,
                           bytes_accessed=bytes_accessed)

    # TODO(synk): on v7x, pltpu.CORE_PARALLEL (or pl.core_map over a 2-TC mesh)
    # is the explicit dual-TensorCore sharding knob; kept at "parallel" here
    # so the same script compiles unchanged on v5e/v6e.
    result = pl.pallas_call(
        _mlp_mask_kernel,
        out_shape=jax.ShapeDtypeStruct((B, out_c), jnp.float32),
        grid=grid,
        in_specs=[
            row_spec((b_tile, F)),        # feature, f32 (cast in-kernel)
            row_spec((b_tile, h1p)),      # embedding contribution + b1, f32
            rep_spec((F, h1p)),           # mask-folded w1 (feature block), bf16
            rep_spec((h1p, h2p)),         # w2, bf16
            rep_spec((1, h2p)),           # b2, f32
            rep_spec((h2p, out_c)),       # w3, bf16
            rep_spec((1, out_c)),         # b3, f32
        ],
        out_specs=row_spec((b_tile, out_c)),
        compiler_params=pltpu.CompilerParams(
            dimension_semantics=("parallel",),
            vmem_limit_bytes=32 * 1024 * 1024),   # raises v5e's 16 MiB default
        cost_estimate=cost,
    )(feature.astype(jnp.float32), emb, w1m,
      prep["w2"], prep["b2"], prep["w3"], prep["b3"])

    if if_norm:
        # result / sqrt(||result||_1 over batch dim).  Reduces across ALL batch
        # tiles, so it stays outside the parallel-gridded kernel; it is a tiny
        # (B, out_c) op and rsqrt maps to the EUP anyway.
        denom = jnp.sum(jnp.abs(result), axis=0, keepdims=True)
        result = result * lax.rsqrt(denom)
    return result, mask_row[None, :]


def fcnet_embedding_mask_ref(params, feature, tissue_index, sex_index, *,
                             limit_feature_number, if_norm=True):
    """Pure-JAX f32 reference (mirrors the PyTorch forward)."""
    mask_sig = jax.nn.sigmoid(params["mask"])
    vals, idx = jax.lax.top_k(mask_sig, limit_feature_number)
    mask_row = jnp.zeros_like(mask_sig).at[idx].set(vals)
    masked = feature * mask_row[None, :]
    x = jnp.concatenate([masked,
                         params["tissue_embedding"][tissue_index],
                         params["sex_embedding"][sex_index]], axis=1)
    h = jnp.maximum(x @ params["w1"] + params["b1"], 0.0)
    h = jnp.maximum(h @ params["w2"] + params["b2"], 0.0)
    y = h @ params["w3"] + params["b3"]
    if if_norm:
        y = y / jnp.sqrt(jnp.sum(jnp.abs(y), axis=0, keepdims=True))
    return y, jnp.broadcast_to(mask_row[None, :], feature.shape)


def init_params(key, feature_channel, output_channel, hidden_list,
                embedding_dim=EMB_DIM):
    """Deterministic synthetic parameter init (shapes from the module __init__)."""
    assert len(hidden_list) == 2, "this script fuses exactly 3 Linear layers"
    d_in = feature_channel + 2 * embedding_dim
    ks = jax.random.split(key, 9)

    def linear(kw, kb, fan_in, fan_out):
        lim = 1.0 / jnp.sqrt(jnp.float32(fan_in))
        w = jax.random.uniform(kw, (fan_in, fan_out), jnp.float32, -lim, lim)
        b = jax.random.uniform(kb, (1, fan_out), jnp.float32, -lim, lim)
        return w, b

    w1, b1 = linear(ks[0], ks[1], d_in, hidden_list[0])
    w2, b2 = linear(ks[2], ks[3], hidden_list[0], hidden_list[1])
    w3, b3 = linear(ks[4], ks[5], hidden_list[1], output_channel)
    return {
        "mask": jax.random.normal(ks[6], (feature_channel,), jnp.float32),
        "tissue_embedding": jax.random.normal(ks[7], (32, embedding_dim), jnp.float32),
        "sex_embedding": jax.random.normal(ks[8], (4, embedding_dim), jnp.float32),
        "w1": w1, "b1": b1, "w2": w2, "b2": b2, "w3": w3, "b3": b3,
    }


if __name__ == "__main__":
    B = 8
    feature_channel = 256
    output_channel = 16
    hidden_list = [128, 64]
    limit_feature_number = 200

    key = jax.random.PRNGKey(0)
    kp, kf, kt, ksx = jax.random.split(key, 4)
    params = init_params(kp, feature_channel, output_channel, hidden_list)
    prep = prepare_params(params, feature_channel)   # one-time weight transform

    feature = jax.random.normal(kf, (B, feature_channel), jnp.float32)
    tissue_index = jax.random.randint(kt, (B,), 0, 32)
    sex_index = jax.random.randint(ksx, (B,), 0, 4)

    fwd = jax.jit(functools.partial(
        fcnet_embedding_mask_forward,
        limit_feature_number=limit_feature_number, if_norm=True))
    result, mask_row = fwd(prep, feature, tissue_index, sex_index)
    result = jax.block_until_ready(result)
    mask_row = jax.block_until_ready(mask_row)

    ref_result, ref_mask = fcnet_embedding_mask_ref(
        params, feature, tissue_index, sex_index,
        limit_feature_number=limit_feature_number, if_norm=True)

    assert result.shape == (B, output_channel)
    assert mask_row.shape == (1, feature_channel)
    # bf16 MXU operands (f32 accumulation, mask folded into bf16 w1) vs all-f32 ref.
    assert jnp.allclose(result, ref_result, rtol=3e-2, atol=3e-2), (
        float(jnp.max(jnp.abs(result - ref_result))))
    assert jnp.allclose(jnp.broadcast_to(mask_row, (B, feature_channel)),
                        ref_mask, rtol=1e-6, atol=1e-6)
    print("KERNEL_OK")
</pallas_src>

<mosaic_0001>
module attributes {stable_mosaic.version = 11 : i64} {
  func.func @_mlp_mask_kernel(%arg0: i32, %arg1: memref<8x256xf32, #tpu.memory_space<vmem>>, %arg2: memref<8x128xf32, #tpu.memory_space<vmem>>, %arg3: memref<256x128xbf16, #tpu.memory_space<vmem>>, %arg4: memref<128x128xbf16, #tpu.memory_space<vmem>>, %arg5: memref<1x128xf32, #tpu.memory_space<vmem>>, %arg6: memref<128x16xbf16, #tpu.memory_space<vmem>>, %arg7: memref<1x16xf32, #tpu.memory_space<vmem>>, %arg8: memref<8x16xf32, #tpu.memory_space<vmem>>) attributes {dimension_semantics = [#tpu.dimension_semantics<parallel>], iteration_bounds = array<i64: 1>, scalar_prefetch = 0 : i64, scratch_operands = 0 : i64, tpu.core_type = #tpu.core_type<tc>, window_params = [{transform_indices = @transform_0, window_bounds = array<i64: 8, 256>}, {transform_indices = @transform_1, window_bounds = array<i64: 8, 128>}, {pipeline_mode = #tpu.pipeline_mode<synchronous>, transform_indices = @transform_2, window_bounds = array<i64: 256, 128>}, {pipeline_mode = #tpu.pipeline_mode<synchronous>, transform_indices = @transform_3, window_bounds = array<i64: 128, 128>}, {pipeline_mode = #tpu.pipeline_mode<synchronous>, transform_indices = @transform_4, window_bounds = array<i64: 1, 128>}, {pipeline_mode = #tpu.pipeline_mode<synchronous>, transform_indices = @transform_5, window_bounds = array<i64: 128, 16>}, {pipeline_mode = #tpu.pipeline_mode<synchronous>, transform_indices = @transform_6, window_bounds = array<i64: 1, 16>}, {transform_indices = @transform_7, window_bounds = array<i64: 8, 16>}]} {
    %c0 = arith.constant 0 : index
    %c0_0 = arith.constant 0 : index
    %0 = vector.load %arg1[%c0, %c0_0] : memref<8x256xf32, #tpu.memory_space<vmem>>, vector<8x256xf32>
    %1 = arith.truncf %0 : vector<8x256xf32> to vector<8x256xbf16>
    %c0_1 = arith.constant 0 : index
    %c0_2 = arith.constant 0 : index
    %2 = vector.load %arg3[%c0_1, %c0_2] : memref<256x128xbf16, #tpu.memory_space<vmem>>, vector<256x128xbf16>
    %cst = arith.constant dense<0.000000e+00> : vector<8x128xf32>
    %3 = tpu.matmul %1, %2, %cst {dimension_numbers = #tpu.dot_dimension_numbers<[1], [0], [0], [1], [0, 0, 1, 1], [], []>} : vector<8x256xbf16>, vector<256x128xbf16>, vector<8x128xf32> -> vector<8x128xf32>
    %c0_3 = arith.constant 0 : index
    %c0_4 = arith.constant 0 : index
    %4 = vector.load %arg2[%c0_3, %c0_4] : memref<8x128xf32, #tpu.memory_space<vmem>>, vector<8x128xf32>
    %5 = arith.addf %3, %4 : vector<8x128xf32>
    %cst_5 = arith.constant 0.000000e+00 : f32
    %6 = vector.broadcast %cst_5 : f32 to vector<8x128xf32>
    %7 = arith.maximumf %5, %6 : vector<8x128xf32>
    %8 = arith.truncf %7 : vector<8x128xf32> to vector<8x128xbf16>
    %c0_6 = arith.constant 0 : index
    %c0_7 = arith.constant 0 : index
    %9 = vector.load %arg4[%c0_6, %c0_7] : memref<128x128xbf16, #tpu.memory_space<vmem>>, vector<128x128xbf16>
    %cst_8 = arith.constant dense<0.000000e+00> : vector<8x128xf32>
    %10 = tpu.matmul %8, %9, %cst_8 {dimension_numbers = #tpu.dot_dimension_numbers<[1], [0], [0], [1], [0, 0, 1, 1], [], []>} : vector<8x128xbf16>, vector<128x128xbf16>, vector<8x128xf32> -> vector<8x128xf32>
    %c0_9 = arith.constant 0 : index
    %c0_10 = arith.constant 0 : index
    %11 = vector.load %arg5[%c0_9, %c0_10] : memref<1x128xf32, #tpu.memory_space<vmem>>, vector<1x128xf32>
    %12 = vector.broadcast %11 : vector<1x128xf32> to vector<8x128xf32>
    %13 = arith.addf %10, %12 : vector<8x128xf32>
    %cst_11 = arith.constant 0.000000e+00 : f32
    %14 = vector.broadcast %cst_11 : f32 to vector<8x128xf32>
    %15 = arith.maximumf %13, %14 : vector<8x128xf32>
    %16 = arith.truncf %15 : vector<8x128xf32> to vector<8x128xbf16>
    %c0_12 = arith.constant 0 : index
    %c0_13 = arith.constant 0 : index
    %17 = vector.load %arg6[%c0_12, %c0_13] : memref<128x16xbf16, #tpu.memory_space<vmem>>, vector<128x16xbf16>
    %cst_14 = arith.constant dense<0.000000e+00> : vector<8x16xf32>
    %18 = tpu.matmul %16, %17, %cst_14 {dimension_numbers = #tpu.dot_dimension_numbers<[1], [0], [0], [1], [0, 0, 1, 1], [], []>} : vector<8x128xbf16>, vector<128x16xbf16>, vector<8x16xf32> -> vector<8x16xf32>
    %c0_15 = arith.constant 0 : index
    %c0_16 = arith.constant 0 : index
    %19 = vector.load %arg7[%c0_15, %c0_16] : memref<1x16xf32, #tpu.memory_space<vmem>>, vector<1x16xf32>
    %20 = vector.broadcast %19 : vector<1x16xf32> to vector<8x16xf32>
    %21 = arith.addf %18, %20 : vector<8x16xf32>
    %c0_17 = arith.constant 0 : index
    %c0_18 = arith.constant 0 : index
    %22 = vector.load %arg8[%c0_17, %c0_18] : memref<8x16xf32, #tpu.memory_space<vmem>>, vector<8x16xf32>
    tpu.vector_store %arg8[%c0_17, %c0_18], %21 {strides = array<i32>} : memref<8x16xf32, #tpu.memory_space<vmem>>, vector<8x16xf32>,
    return
  }
  func.func @transform_0(%arg0: i32) -> (i32, i32) {
    %c0_i32 = arith.constant 0 : i32
    %c0_i32_0 = arith.constant 0 : i32
    return %arg0, %c0_i32 : i32, i32
  }
  func.func @transform_1(%arg0: i32) -> (i32, i32) {
    %c0_i32 = arith.constant 0 : i32
    %c0_i32_0 = arith.constant 0 : i32
    return %arg0, %c0_i32 : i32, i32
  }
  func.func @transform_2(%arg0: i32) -> (i32, i32) {
    %c0_i32 = arith.constant 0 : i32
    %c0_i32_0 = arith.constant 0 : i32
    %c0_i32_1 = arith.constant 0 : i32
    return %c0_i32, %c0_i32_0 : i32, i32
  }
  func.func @transform_3(%arg0: i32) -> (i32, i32) {
    %c0_i32 = arith.constant 0 : i32
    %c0_i32_0 = arith.constant 0 : i32
    %c0_i32_1 = arith.constant 0 : i32
    return %c0_i32, %c0_i32_0 : i32, i32
  }
  func.func @transform_4(%arg0: i32) -> (i32, i32) {
    %c0_i32 = arith.constant 0 : i32
    %c0_i32_0 = arith.constant 0 : i32
    %c0_i32_1 = arith.constant 0 : i32
    return %c0_i32, %c0_i32_0 : i32, i32
  }
  func.func @transform_5(%arg0: i32) -> (i32, i32) {
    %c0_i32 = arith.constant 0 : i32
    %c0_i32_0 = arith.constant 0 : i32
    %c0_i32_1 = arith.constant 0 : i32
    return %c0_i32, %c0_i32_0 : i32, i32
  }
  func.func @transform_6(%arg0: i32) -> (i32, i32) {
    %c0_i32 = arith.constant 0 : i32
    %c0_i32_0 = arith.constant 0 : i32
    %c0_i32_1 = arith.constant 0 : i32
    return %c0_i32, %c0_i32_0 : i32, i32
  }
  func.func @transform_7(%arg0: i32) -> (i32, i32) {
    %c0_i32 = arith.constant 0 : i32
    %c0_i32_0 = arith.constant 0 : i32
    return %arg0, %c0_i32 : i32, i32
  }
}

</mosaic_0001>

<llo_original>
// kernel: fcnet_embedding_mask_forward.1
$region0: #{fcnet_embedding_mask_forward.1}
  #allocation0 [shape = 'u32[]', space=smem, size = 0x4, offset = 0x4, fixed_abs, tag = 'smem constant byte address 0x4 - core index']
  #allocation1 [shape = 'u32[144,128]{1,0:T(1,128)}', space=vmem, size = 0x12000, scoped, tag = 'internal scratch']
  %s0 = inlined_call_operand.vmem [shape: f32[8,256], index: 0, kind: input, shape index: {}]
  %s1 = inlined_call_operand.vmem [shape: f32[8,128], index: 1, kind: input, shape index: {}]
  %s2 = inlined_call_operand.vmem [shape: bf16[256,128], index: 2, kind: input, shape index: {}]
  %s3 = inlined_call_operand.vmem [shape: bf16[128,128], index: 3, kind: input, shape index: {}]
  %s4 = inlined_call_operand.vmem [shape: f32[1,128], index: 4, kind: input, shape index: {}]
  %s5 = inlined_call_operand.vmem [shape: bf16[128,16], index: 5, kind: input, shape index: {}]
  %s6 = inlined_call_operand.vmem [shape: f32[1,16], index: 6, kind: input, shape index: {}]
  %s7 = inlined_call_operand.vmem [shape: f32[8,16], index: 7, kind: output, shape index: {}]
  %s8 = sld [smem:[#allocation0]]
  $region38: #{fcnet_embedding_mask_forward.1} parent=0
    _
  %s10 = ssub.s32 1, %s8
  %s11 = scalar_select 0, %s10, %s8
  // Predicated region
  $region2: #{fcnet_embedding_mask_forward.1} parent=0 // pred_check
    _
  $region3: #{fcnet_embedding_mask_forward.1} parent=0 // pred_check_branch
    %13 = sbr.rel (0) target = $region5
  $region4: #{fcnet_embedding_mask_forward.1} parent=0 // pred_region
    _
  $region5: #{fcnet_embedding_mask_forward.1} parent=0 // pred_fallthru
    _
  // Predicated region
  $region6: #{fcnet_embedding_mask_forward.1} parent=0 // pred_check
    _
  $region7: #{fcnet_embedding_mask_forward.1} parent=0 // pred_check_branch
    %15 = sbr.rel (0) target = $region9
  $region8: #{fcnet_embedding_mask_forward.1} parent=0 // pred_region
    _
  $region9: #{fcnet_embedding_mask_forward.1} parent=0 // pred_fallthru
    _
  // Predicated region
  $region10: #{fcnet_embedding_mask_forward.1} parent=0 // pred_check
    _
  $region11: #{fcnet_embedding_mask_forward.1} parent=0 // pred_check_branch
    %17 = sbr.rel (0) target = $region13
  $region12: #{fcnet_embedding_mask_forward.1} parent=0 // pred_region
    _
  $region13: #{fcnet_embedding_mask_forward.1} parent=0 // pred_fallthru
    _
  // Predicated region
  $region14: #{fcnet_embedding_mask_forward.1} parent=0 // pred_check
    _
  $region15: #{fcnet_embedding_mask_forward.1} parent=0 // pred_check_branch
    %19 = sbr.rel (0) target = $region17
  $region16: #{fcnet_embedding_mask_forward.1} parent=0 // pred_region
    _
  $region17: #{fcnet_embedding_mask_forward.1} parent=0 // pred_fallthru
    _
  // Predicated region
  $region18: #{fcnet_embedding_mask_forward.1} parent=0 // pred_check
    _
  $region19: #{fcnet_embedding_mask_forward.1} parent=0 // pred_check_branch
    %21 = sbr.rel (0) target = $region21
  $region20: #{fcnet_embedding_mask_forward.1} parent=0 // pred_region
    _
  $region21: #{fcnet_embedding_mask_forward.1} parent=0 // pred_fallthru
    _
  // Predicated region
  $region22: #{fcnet_embedding_mask_forward.1} parent=0 // pred_check
    _
  $region23: #{fcnet_embedding_mask_forward.1} parent=0 // pred_check_branch
    %23 = sbr.rel (0) target = $region25
  $region24: #{fcnet_embedding_mask_forward.1} parent=0 // pred_region
    _
  $region25: #{fcnet_embedding_mask_forward.1} parent=0 // pred_fallthru
    _
  // Predicated region
  $region26: #{fcnet_embedding_mask_forward.1} parent=0 // pred_check
    _
  $region27: #{fcnet_embedding_mask_forward.1} parent=0 // pred_check_branch
    %25 = sbr.rel (0) target = $region29
  $region28: #{fcnet_embedding_mask_forward.1} parent=0 // pred_region
    _
  $region29: #{fcnet_embedding_mask_forward.1} parent=0 // pred_fallthru
    _
  %v27 = vld [vmem:[%s0] sm:$0xff]
  %v28 = vld [vmem:[%s0 + $0x8] sm:$0xff]
  %v29 = vpack.c.bf16 %v27, %v27
  %v30 = vpack.c.bf16 %v28, %v28
  %v31 = vld [vmem:[%s2] sm:$0xf]
  %v32 = vld [vmem:[%s2 + $0x4] sm:$0xf]
  %v33 = vld [vmem:[%s2 + $0x8] sm:$0xf]
  %v34 = vld [vmem:[%s2 + $0xc] sm:$0xf]
  %v35 = vld [vmem:[%s2 + $0x10] sm:$0xf]
  %v36 = vld [vmem:[%s2 + $0x14] sm:$0xf]
  %v37 = vld [vmem:[%s2 + $0x18] sm:$0xf]
  %v38 = vld [vmem:[%s2 + $0x1c] sm:$0xf]
  %v39 = vld [vmem:[%s2 + $0x20] sm:$0xf]
  %v40 = vld [vmem:[%s2 + $0x24] sm:$0xf]
  %v41 = vld [vmem:[%s2 + $0x28] sm:$0xf]
  %v42 = vld [vmem:[%s2 + $0x2c] sm:$0xf]
  %v43 = vld [vmem:[%s2 + $0x30] sm:$0xf]
  %v44 = vld [vmem:[%s2 + $0x34] sm:$0xf]
  %v45 = vld [vmem:[%s2 + $0x38] sm:$0xf]
  %v46 = vld [vmem:[%s2 + $0x3c] sm:$0xf]
  %v47 = vld [vmem:[%s2 + $0x40] sm:$0xf]
  %v48 = vld [vmem:[%s2 + $0x44] sm:$0xf]
  %v49 = vld [vmem:[%s2 + $0x48] sm:$0xf]
  %v50 = vld [vmem:[%s2 + $0x4c] sm:$0xf]
  %v51 = vld [vmem:[%s2 + $0x50] sm:$0xf]
  %v52 = vld [vmem:[%s2 + $0x54] sm:$0xf]
  %v53 = vld [vmem:[%s2 + $0x58] sm:$0xf]
  %v54 = vld [vmem:[%s2 + $0x5c] sm:$0xf]
  %v55 = vld [vmem:[%s2 + $0x60] sm:$0xf]
  %v56 = vld [vmem:[%s2 + $0x64] sm:$0xf]
  %v57 = vld [vmem:[%s2 + $0x68] sm:$0xf]
  %v58 = vld [vmem:[%s2 + $0x6c] sm:$0xf]
  %v59 = vld [vmem:[%s2 + $0x70] sm:$0xf]
  %v60 = vld [vmem:[%s2 + $0x74] sm:$0xf]
  %v61 = vld [vmem:[%s2 + $0x78] sm:$0xf]
  %v62 = vld [vmem:[%s2 + $0x7c] sm:$0xf]
  %v63 = vld [vmem:[%s1] sm:$0xff]
  %v96 = vunpack.c.l.b16 %v31
  %v97 = vunpack.c.l.b16 %v32
  %v98 = vunpack.c.l.b16 %v33
  %v99 = vunpack.c.l.b16 %v34
  %v100 = vunpack.c.l.b16 %v35
  %v101 = vunpack.c.l.b16 %v36
  %v102 = vunpack.c.l.b16 %v37
  %v103 = vunpack.c.l.b16 %v38
  %v104 = vunpack.c.l.b16 %v39
  %v105 = vunpack.c.l.b16 %v40
  %v106 = vunpack.c.l.b16 %v41
  %v107 = vunpack.c.l.b16 %v42
  %v108 = vunpack.c.l.b16 %v43
  %v109 = vunpack.c.l.b16 %v44
  %v110 = vunpack.c.l.b16 %v45
  %v111 = vunpack.c.l.b16 %v46
  %v112 = vunpack.c.l.b16 %v47
  %v113 = vunpack.c.l.b16 %v48
  %v114 = vunpack.c.l.b16 %v49
  %v115 = vunpack.c.l.b16 %v50
  %v116 = vunpack.c.l.b16 %v51
  %v117 = vunpack.c.l.b16 %v52
  %v118 = vunpack.c.l.b16 %v53
  %v119 = vunpack.c.l.b16 %v54
  %v120 = vunpack.c.l.b16 %v55
  %v121 = vunpack.c.l.b16 %v56
  %v122 = vunpack.c.l.b16 %v57
  %v123 = vunpack.c.l.b16 %v58
  %v124 = vunpack.c.l.b16 %v59
  %v125 = vunpack.c.l.b16 %v60
  %v126 = vunpack.c.l.b16 %v61
  %v127 = vunpack.c.l.b16 %v62
  %v128 = vpack.c.b16 %v97, %v96
  %v129 = vpack.c.b16 %v99, %v98
  %v130 = vpack.c.b16 %v101, %v100
  %v131 = vpack.c.b16 %v103, %v102
  %v132 = vpack.c.b16 %v105, %v104
  %v133 = vpack.c.b16 %v107, %v106
  %v134 = vpack.c.b16 %v109, %v108
  %v135 = vpack.c.b16 %v111, %v110
  %v136 = vpack.c.b16 %v113, %v112
  %v137 = vpack.c.b16 %v115, %v114
  %v138 = vpack.c.b16 %v117, %v116
  %v139 = vpack.c.b16 %v119, %v118
  %v140 = vpack.c.b16 %v121, %v120
  %v141 = vpack.c.b16 %v123, %v122
  %v142 = vpack.c.b16 %v125, %v124
  %v143 = vpack.c.b16 %v127, %v126
  %160 = vmatprep.subr.bf16.mxu0 0
  %161 = vmatpush1.bf16.msra.mxu0 %v128
  %162 = vmatprep.subr.bf16.mxu0 0
  %163 = vmatpush1.bf16.msra.mxu0 %v129
  %164 = vmatprep.subr.bf16.mxu0 0
  %165 = vmatpush1.bf16.msra.mxu0 %v130
  %166 = vmatprep.subr.bf16.mxu0 0
  %167 = vmatpush1.bf16.msra.mxu0 %v131
  %168 = vmatprep.subr.bf16.mxu0 0
  %169 = vmatpush1.bf16.msra.mxu0 %v132
  %170 = vmatprep.subr.bf16.mxu0 0
  %171 = vmatpush1.bf16.msra.mxu0 %v133
  %172 = vmatprep.subr.bf16.mxu0 0
  %173 = vmatpush1.bf16.msra.mxu0 %v134
  %174 = vmatprep.subr.bf16.mxu0 0
  %175 = vmatpush1.bf16.msra.mxu0 %v135
  %176 = vmatprep.subr.bf16.mxu0 0
  %177 = vmatpush1.bf16.msra.mxu0 %v136
  %178 = vmatprep.subr.bf16.mxu0 0
  %179 = vmatpush1.bf16.msra.mxu0 %v137
  %180 = vmatprep.subr.bf16.mxu0 0
  %181 = vmatpush1.bf16.msra.mxu0 %v138
  %182 = vmatprep.subr.bf16.mxu0 0
  %183 = vmatpush1.bf16.msra.mxu0 %v139
  %184 = vmatprep.subr.bf16.mxu0 0
  %185 = vmatpush1.bf16.msra.mxu0 %v140
  %186 = vmatprep.subr.bf16.mxu0 0
  %187 = vmatpush1.bf16.msra.mxu0 %v141
  %188 = vmatprep.subr.bf16.mxu0 0
  %189 = vmatpush1.bf16.msra.mxu0 %v142
  %190 = vmatprep.subr.bf16.mxu0 0
  %191 = vmatpush1.bf16.msra.mxu0 %v143
  %192 = vmatprep.mubr.bf16.mxu0 %v30
  %193 = vmatmul.mubr.bf16.gmra.mrb[0].mxu0 %v29
  %v194 = vpop.f32.mrb[0].mxu0
  %v195 = vadd.f32 %v63, %v194
  %v196 = vpop.f32.mrb[0].mxu0
  %v197 = vpop.f32.mrb[0].mxu0
  %v198 = vpop.f32.mrb[0].mxu0
  %199 = vdwg.mxu0
  %v200 = vmax.f32 %v195, 0.0
  %v201 = vpack.c.bf16 %v200, %v200
  %v202 = vld [vmem:[%s3] sm:$0xf]
  %v203 = vld [vmem:[%s3 + $0x4] sm:$0xf]
  %v204 = vld [vmem:[%s3 + $0x8] sm:$0xf]
  %v205 = vld [vmem:[%s3 + $0xc] sm:$0xf]
  %v206 = vld [vmem:[%s3 + $0x10] sm:$0xf]
  %v207 = vld [vmem:[%s3 + $0x14] sm:$0xf]
  %v208 = vld [vmem:[%s3 + $0x18] sm:$0xf]
  %v209 = vld [vmem:[%s3 + $0x1c] sm:$0xf]
  %v210 = vld [vmem:[%s3 + $0x20] sm:$0xf]
  %v211 = vld [vmem:[%s3 + $0x24] sm:$0xf]
  %v212 = vld [vmem:[%s3 + $0x28] sm:$0xf]
  %v213 = vld [vmem:[%s3 + $0x2c] sm:$0xf]
  %v214 = vld [vmem:[%s3 + $0x30] sm:$0xf]
  %v215 = vld [vmem:[%s3 + $0x34] sm:$0xf]
  %v216 = vld [vmem:[%s3 + $0x38] sm:$0xf]
  %v217 = vld [vmem:[%s3 + $0x3c] sm:$0xf]
  %v218 = vld [vmem:[%s4] sm:$0x1]
  %v220 = vlaneseq
  %v221 = vshrl.u32 %v220, 7
  %v222 = vsub.s32 0, %v221
  %v223 = vrot.slane %v218, %v222
  %v241 = vunpack.c.l.b16 %v202
  %v242 = vunpack.c.l.b16 %v203
  %v243 = vunpack.c.l.b16 %v204
  %v244 = vunpack.c.l.b16 %v205
  %v245 = vunpack.c.l.b16 %v206
  %v246 = vunpack.c.l.b16 %v207
  %v247 = vunpack.c.l.b16 %v208
  %v248 = vunpack.c.l.b16 %v209
  %v249 = vunpack.c.l.b16 %v210
  %v250 = vunpack.c.l.b16 %v211
  %v251 = vunpack.c.l.b16 %v212
  %v252 = vunpack.c.l.b16 %v213
  %v253 = vunpack.c.l.b16 %v214
  %v254 = vunpack.c.l.b16 %v215
  %v255 = vunpack.c.l.b16 %v216
  %v256 = vunpack.c.l.b16 %v217
  %v257 = vpack.c.b16 %v242, %v241
  %v258 = vpack.c.b16 %v244, %v243
  %v259 = vpack.c.b16 %v246, %v245
  %v260 = vpack.c.b16 %v248, %v247
  %v261 = vpack.c.b16 %v250, %v249
  %v262 = vpack.c.b16 %v252, %v251
  %v263 = vpack.c.b16 %v254, %v253
  %v264 = vpack.c.b16 %v256, %v255
  %273 = vmatprep.subr.bf16.mxu0 0
  %274 = vmatpush1.bf16.msra.mxu0 %v257
  %275 = vmatprep.subr.bf16.mxu0 0
  %276 = vmatpush1.bf16.msra.mxu0 %v258
  %277 = vmatprep.subr.bf16.mxu0 0
  %278 = vmatpush1.bf16.msra.mxu0 %v259
  %279 = vmatprep.subr.bf16.mxu0 0
  %280 = vmatpush1.bf16.msra.mxu0 %v260
  %281 = vmatprep.subr.bf16.mxu0 0
  %282 = vmatpush1.bf16.msra.mxu0 %v261
  %283 = vmatprep.subr.bf16.mxu0 0
  %284 = vmatpush1.bf16.msra.mxu0 %v262
  %285 = vmatprep.subr.bf16.mxu0 0
  %286 = vmatpush1.bf16.msra.mxu0 %v263
  %287 = vmatprep.subr.bf16.mxu0 0
  %288 = vmatpush1.bf16.msra.mxu0 %v264
  %289 = vmatprep.subr.bf16.mxu0 0
  %290 = vmatpush1.bf16.msra.mxu0 0
  %291 = vmatprep.subr.bf16.mxu0 0
  %292 = vmatpush1.bf16.msra.mxu0 0
  %293 = vmatprep.subr.bf16.mxu0 0
  %294 = vmatpush1.bf16.msra.mxu0 0
  %295 = vmatprep.subr.bf16.mxu0 0
  %296 = vmatpush1.bf16.msra.mxu0 0
  %297 = vmatprep.subr.bf16.mxu0 0
  %298 = vmatpush1.bf16.msra.mxu0 0
  %299 = vmatprep.subr.bf16.mxu0 0
  %300 = vmatpush1.bf16.msra.mxu0 0
  %301 = vmatprep.subr.bf16.mxu0 0
  %302 = vmatpush1.bf16.msra.mxu0 0
  %303 = vmatprep.subr.bf16.mxu0 0
  %304 = vmatpush1.bf16.msra.mxu0 0
  %305 = vmatprep.mubr.bf16.mxu0 0
  %306 = vmatmul.mubr.bf16.gmra.mrb[0].mxu0 %v201
  %v307 = vpop.f32.mrb[0].mxu0
  %v308 = vadd.f32 %v223, %v307
  %v309 = vpop.f32.mrb[0].mxu0
  %v310 = vpop.f32.mrb[0].mxu0
  %v311 = vpop.f32.mrb[0].mxu0
  %312 = vdwg.mxu0
  %v313 = vmax.f32 %v308, 0.0
  %v314 = vpack.c.bf16 %v313, %v313
  %v315 = vld [vmem:[%s5] sm:$0xf]
  %v316 = vld [vmem:[%s5 + $0x4] sm:$0xf]
  %v317 = vld [vmem:[%s5 + $0x8] sm:$0xf]
  %v318 = vld [vmem:[%s5 + $0xc] sm:$0xf]
  %v319 = vld [vmem:[%s5 + $0x10] sm:$0xf]
  %v320 = vld [vmem:[%s5 + $0x14] sm:$0xf]
  %v321 = vld [vmem:[%s5 + $0x18] sm:$0xf]
  %v322 = vld [vmem:[%s5 + $0x1c] sm:$0xf]
  %v323 = vld [vmem:[%s5 + $0x20] sm:$0xf]
  %v324 = vld [vmem:[%s5 + $0x24] sm:$0xf]
  %v325 = vld [vmem:[%s5 + $0x28] sm:$0xf]
  %v326 = vld [vmem:[%s5 + $0x2c] sm:$0xf]
  %v327 = vld [vmem:[%s5 + $0x30] sm:$0xf]
  %v328 = vld [vmem:[%s5 + $0x34] sm:$0xf]
  %v329 = vld [vmem:[%s5 + $0x38] sm:$0xf]
  %v330 = vld [vmem:[%s5 + $0x3c] sm:$0xf]
  %v331 = vld [vmem:[%s6] sm:$0x1]
  %v333 = vlaneseq
  %v334 = vshrl.u32 %v333, 7
  %v335 = vsub.s32 0, %v334
  %v336 = vrot.slane %v331, %v335
  %v354 = vunpack.c.l.b16 %v315
  %v355 = vunpack.c.l.b16 %v316
  %v356 = vunpack.c.l.b16 %v317
  %v357 = vunpack.c.l.b16 %v318
  %v358 = vunpack.c.l.b16 %v319
  %v359 = vunpack.c.l.b16 %v320
  %v360 = vunpack.c.l.b16 %v321
  %v361 = vunpack.c.l.b16 %v322
  %v362 = vunpack.c.l.b16 %v323
  %v363 = vunpack.c.l.b16 %v324
  %v364 = vunpack.c.l.b16 %v325
  %v365 = vunpack.c.l.b16 %v326
  %v366 = vunpack.c.l.b16 %v327
  %v367 = vunpack.c.l.b16 %v328
  %v368 = vunpack.c.l.b16 %v329
  %v369 = vunpack.c.l.b16 %v330
  %v370 = vpack.c.b16 %v355, %v354
  %v371 = vpack.c.b16 %v357, %v356
  %v372 = vpack.c.b16 %v359, %v358
  %v373 = vpack.c.b16 %v361, %v360
  %v374 = vpack.c.b16 %v363, %v362
  %v375 = vpack.c.b16 %v365, %v364
  %v376 = vpack.c.b16 %v367, %v366
  %v377 = vpack.c.b16 %v369, %v368
  %386 = vmatprep.subr.bf16.mxu0 0
  %387 = vmatpush1.bf16.msra.mxu0 %v370
  %388 = vmatprep.subr.bf16.mxu0 0
  %389 = vmatpush1.bf16.msra.mxu0 %v371
  %390 = vmatprep.subr.bf16.mxu0 0
  %391 = vmatpush1.bf16.msra.mxu0 %v372
  %392 = vmatprep.subr.bf16.mxu0 0
  %393 = vmatpush1.bf16.msra.mxu0 %v373
  %394 = vmatprep.subr.bf16.mxu0 0
  %395 = vmatpush1.bf16.msra.mxu0 %v374
  %396 = vmatprep.subr.bf16.mxu0 0
  %397 = vmatpush1.bf16.msra.mxu0 %v375
  %398 = vmatprep.subr.bf16.mxu0 0
  %399 = vmatpush1.bf16.msra.mxu0 %v376
  %400 = vmatprep.subr.bf16.mxu0 0
  %401 = vmatpush1.bf16.msra.mxu0 %v377
  %402 = vmatprep.subr.bf16.mxu0 0
  %403 = vmatpush1.bf16.msra.mxu0 0
  %404 = vmatprep.subr.bf16.mxu0 0
  %405 = vmatpush1.bf16.msra.mxu0 0
  %406 = vmatprep.subr.bf16.mxu0 0
  %407 = vmatpush1.bf16.msra.mxu0 0
  %408 = vmatprep.subr.bf16.mxu0 0
  %409 = vmatpush1.bf16.msra.mxu0 0
  %410 = vmatprep.subr.bf16.mxu0 0
  %411 = vmatpush1.bf16.msra.mxu0 0
  %412 = vmatprep.subr.bf16.mxu0 0
  %413 = vmatpush1.bf16.msra.mxu0 0
  %414 = vmatprep.subr.bf16.mxu0 0
  %415 = vmatpush1.bf16.msra.mxu0 0
  %416 = vmatprep.subr.bf16.mxu0 0
  %417 = vmatpush1.bf16.msra.mxu0 0
  %418 = vmatprep.mubr.bf16.mxu0 0
  %419 = vmatmul.mubr.bf16.gmra.mrb[0].mxu0 %v314
  %v420 = vpop.f32.mrb[0].mxu0
  %v421 = vadd.f32 %v336, %v420
  %v422 = vpop.f32.mrb[0].mxu0
  %v423 = vpop.f32.mrb[0].mxu0
  %v424 = vpop.f32.mrb[0].mxu0
  %425 = vdwg.mxu0
  %vm426 = vcmask 130048
  %427 = vst.msk [vmem:[%s7] sm:$0xff] %vm426, %v421
  // Predicated region
  $region30: #{fcnet_embedding_mask_forward.1} parent=0 // pred_check
    _
  $region31: #{fcnet_embedding_mask_forward.1} parent=0 // pred_check_branch
    %429 = sbr.rel (0) target = $region33
  $region32: #{fcnet_embedding_mask_forward.1} parent=0 // pred_region
    _
  $region33: #{fcnet_embedding_mask_forward.1} parent=0 // pred_fallthru
    _
  // Predicated region
  $region34: #{fcnet_embedding_mask_forward.1} parent=0 // pred_check
    _
  $region35: #{fcnet_embedding_mask_forward.1} parent=0 // pred_check_branch
    %431 = sbr.rel (0) target = $region37
  $region36: #{fcnet_embedding_mask_forward.1} parent=0 // pred_region
    _
  $region37: #{fcnet_embedding_mask_forward.1} parent=0 // pred_fallthru
    _

</llo_original>
